<compile_context>
chip_gen: v7x
topology: tpu7x:2x2x1
jax: 0.10.0
libtpu: 0.0.40
codegen_flags: <defaults>
</compile_context>

<pallas_src>
import functools

import jax
import jax.numpy as jnp
from jax.experimental import pallas as pl
from jax.experimental.pallas import tpu as pltpu


def _round_up(x, m):
    return ((x + m - 1) // m) * m


def _pick_tile(n_pad, candidates):
    for c in candidates:
        if n_pad % c == 0:
            return c
    return 128


def prepare_adjacency(adj_matrix, num_nodes=None):
    """Pad + cast the adjacency to bf16 once (0/1 entries are exact in bf16).

    Call this once and reuse the result across GCN layers so the O(N^2)
    conversion pass is amortized instead of paid on every layer call.
    """
    n = adj_matrix.shape[0] if num_nodes is None else num_nodes
    n_pad = _round_up(max(n, 1), 128)
    adj_p = jnp.zeros((n_pad, n_pad), jnp.bfloat16)
    return adj_p.at[:n, :n].set(adj_matrix.astype(jnp.bfloat16))


# --------------------- Kernel 1: projection  h = feats @ W.T + b -------------

def _proj_kernel(feats_ref, w_ref, b_ref, h_ref):
    h = jnp.dot(feats_ref[...], w_ref[...], preferred_element_type=jnp.float32)
    h_ref[...] = (h + b_ref[...]).astype(h_ref.dtype)


# --------------------- Kernel 2: aggregation  out = (adj @ h + h) / deg ------

def _agg_kernel(adj_ref, h_ref, out_ref, acc_ref, *, tm, tk, deg_col):
    i = pl.program_id(0)
    k = pl.program_id(1)

    @pl.when(k == 0)
    def _init():
        acc_ref[...] = jnp.zeros_like(acc_ref)

    # bf16 adj tile x bf16 h block on the MXU with f32 accumulation.  The row
    # degree rides along in h's `deg_col` ones-column (0/1 x 1.0 -> exact).
    hk = h_ref[pl.ds(pl.multiple_of(k * tk, 128), tk), :]
    acc_ref[...] += jnp.dot(adj_ref[...], hk,
                            preferred_element_type=jnp.float32)

    @pl.when(k == pl.num_programs(1) - 1)
    def _finalize():
        # Self loop: +h rows of this output tile (free slice of resident h);
        # its ones-column entry is the +1 on the degree.
        h_self = h_ref[pl.ds(pl.multiple_of(i * tm, 128), tm), :]
        total = acc_ref[...] + h_self.astype(jnp.float32)
        deg = total[:, deg_col:deg_col + 1]          # (tm, 1), exact integer >= 1
        out_ref[...] = (total / deg).astype(out_ref.dtype)


# --------------------------------- Wrapper -----------------------------------

@jax.jit
def gcn_layer(node_feats, adj_matrix, weight, bias):
    """node_feats: [N, c_in]; adj_matrix: [N, N] (any float) or a pre-prepared
    padded bf16 [n_pad, n_pad] from prepare_adjacency(); weight: [c_out, c_in]
    (PyTorch Linear layout); bias: [c_out]."""
    n, c_in = node_feats.shape
    c_out = weight.shape[0]

    n_pad = _round_up(n, 128)
    c_pad = _round_up(c_out + 1, 128)          # +1: ones column carries the degree
    deg_col = c_out

    tm = _pick_tile(n_pad, (512, 256, 128))                        # row tile
    tk = n_pad if n_pad <= 2048 else _pick_tile(n_pad, (2048, 1024, 512, 256, 128))

    # Adjacency: use a pre-prepared padded bf16 matrix as-is (amortized path),
    # otherwise pad + cast here (costs one extra O(N^2) pass for this call).
    if adj_matrix.shape == (n_pad, n_pad) and adj_matrix.dtype == jnp.bfloat16:
        adj_p = adj_matrix
    else:
        adj_p = jnp.zeros((n_pad, n_pad), jnp.bfloat16).at[:n, :n].set(
            adj_matrix.astype(jnp.bfloat16))

    feats_p = jnp.zeros((n_pad, c_in), jnp.float32).at[:n, :].set(
        node_feats.astype(jnp.float32))
    w_p = jnp.zeros((c_in, c_pad), jnp.float32).at[:, :c_out].set(
        weight.T.astype(jnp.float32))
    b_p = jnp.zeros((1, c_pad), jnp.float32)
    b_p = b_p.at[0, :c_out].set(bias.astype(jnp.float32))
    b_p = b_p.at[0, deg_col].set(1.0)          # ones column -> h[:, deg_col] == 1

    # ---- Kernel 1: h = feats @ W.T + b, emitted once in bf16 ----------------
    h = pl.pallas_call(
        _proj_kernel,
        out_shape=jax.ShapeDtypeStruct((n_pad, c_pad), jnp.bfloat16),
        grid_spec=pltpu.PrefetchScalarGridSpec(
            num_scalar_prefetch=0,
            grid=(n_pad // tm,),
            in_specs=[
                pl.BlockSpec((tm, c_in), lambda i: (i, 0)),
                pl.BlockSpec((c_in, c_pad), lambda i: (0, 0)),
                pl.BlockSpec((1, c_pad), lambda i: (0, 0)),
            ],
            out_specs=pl.BlockSpec((tm, c_pad), lambda i: (i, 0)),
        ),
        compiler_params=pltpu.CompilerParams(
            dimension_semantics=("parallel",)),
    )(feats_p, w_p, b_p)

    # ---- Kernel 2: out = (adj @ h + h) / deg, h resident in VMEM ------------
    # TODO(synk): for graphs where h cannot stay resident (roughly > 90k nodes
    # at c_pad=128 on v7x's 64 MiB VMEM), stream the h k-block per grid step.
    h_bytes = n_pad * c_pad * 2
    vmem_est = (h_bytes                     # resident h
                + 2 * tm * tk * 2           # double-buffered adj tiles
                + 2 * tm * c_pad * 4        # double-buffered output tiles
                + tm * c_pad * 4)           # f32 accumulator
    vmem_limit = min(100 * 2**20, max(32 * 2**20, int(vmem_est * 1.5) + (4 << 20)))

    out_p = pl.pallas_call(
        functools.partial(_agg_kernel, tm=tm, tk=tk, deg_col=deg_col),
        out_shape=jax.ShapeDtypeStruct((n_pad, c_pad), jnp.float32),
        grid_spec=pltpu.PrefetchScalarGridSpec(
            num_scalar_prefetch=0,
            grid=(n_pad // tm, n_pad // tk),
            in_specs=[
                pl.BlockSpec((tm, tk), lambda i, k: (i, k)),         # adj tile (bf16)
                pl.BlockSpec((n_pad, c_pad), lambda i, k: (0, 0)),   # h, resident
            ],
            out_specs=pl.BlockSpec((tm, c_pad), lambda i, k: (i, 0)),
            scratch_shapes=[pltpu.VMEM((tm, c_pad), jnp.float32)],
        ),
        compiler_params=pltpu.CompilerParams(
            dimension_semantics=("parallel", "arbitrary"),
            vmem_limit_bytes=vmem_limit),
    )(adj_p, h)

    return out_p[:n, :c_out].astype(node_feats.dtype)


# --------------------------------- Reference ---------------------------------

def gcn_layer_ref(node_feats, adj_matrix, weight, bias):
    """Pure-JAX reference matching the PyTorch forward (full f32 precision)."""
    n = node_feats.shape[0]
    self_adj = adj_matrix + jnp.eye(n, dtype=adj_matrix.dtype)
    deg = jnp.sum(self_adj, axis=-1, keepdims=True)
    h = jnp.dot(node_feats, weight.T, precision=jax.lax.Precision.HIGHEST) + bias
    agg = jnp.dot(self_adj, h, precision=jax.lax.Precision.HIGHEST)
    return agg / deg


def _make_inputs(key, num_nodes, c_in, c_out):
    k1, k2, k3, k4 = jax.random.split(key, 4)
    node_feats = jax.random.normal(k1, (num_nodes, c_in), dtype=jnp.float32)
    adj_matrix = (jax.random.uniform(k2, (num_nodes, num_nodes)) > 0.5).astype(
        jnp.float32)
    bound = 1.0 / (c_in ** 0.5)
    weight = jax.random.uniform(k3, (c_out, c_in), minval=-bound, maxval=bound,
                                dtype=jnp.float32)
    bias = jax.random.uniform(k4, (c_out,), minval=-bound, maxval=bound,
                              dtype=jnp.float32)
    return node_feats, adj_matrix, weight, bias


if __name__ == "__main__":
    key = jax.random.PRNGKey(0)
    key_small, key_big = jax.random.split(key, 2)

    # Tolerance note: h is intentionally bf16 in the aggregation matmul
    # (perf tradeoff sanctioned by review); adj and degree stay exact.
    ATOL = RTOL = 1e-2

    # Small case (single tile), raw adjacency path.
    nf, adj, w, b = _make_inputs(key_small, num_nodes=8, c_in=16, c_out=32)
    out = jax.block_until_ready(gcn_layer(nf, adj, w, b))
    ref = gcn_layer_ref(nf, adj, w, b)
    assert out.shape == (8, 32)
    assert jnp.allclose(out, ref, atol=ATOL, rtol=RTOL)

    # Larger case (300 nodes -> padded to 384, 3 row tiles), amortized
    # pre-prepared bf16 adjacency path.
    nf, adj, w, b = _make_inputs(key_big, num_nodes=300, c_in=16, c_out=32)
    adj_prepped = prepare_adjacency(adj, num_nodes=300)
    out = jax.block_until_ready(gcn_layer(nf, adj_prepped, w, b))
    ref = gcn_layer_ref(nf, adj, w, b)
    assert out.shape == (300, 32)
    assert jnp.allclose(out, ref, atol=ATOL, rtol=RTOL)

    print("KERNEL_OK")
</pallas_src>

<mosaic_0001>
module attributes {stable_mosaic.version = 11 : i64} {
  func.func @_proj_kernel(%arg0: i32, %arg1: memref<128x16xf32, #tpu.memory_space<vmem>>, %arg2: memref<16x128xf32, #tpu.memory_space<vmem>>, %arg3: memref<1x128xf32, #tpu.memory_space<vmem>>, %arg4: memref<128x128xbf16, #tpu.memory_space<vmem>>) attributes {dimension_semantics = [#tpu.dimension_semantics<parallel>], iteration_bounds = array<i64: 1>, scalar_prefetch = 0 : i64, scratch_operands = 0 : i64, tpu.core_type = #tpu.core_type<tc>, window_params = [{transform_indices = @transform_0, window_bounds = array<i64: 128, 16>}, {pipeline_mode = #tpu.pipeline_mode<synchronous>, transform_indices = @transform_1, window_bounds = array<i64: 16, 128>}, {pipeline_mode = #tpu.pipeline_mode<synchronous>, transform_indices = @transform_2, window_bounds = array<i64: 1, 128>}, {transform_indices = @transform_3, window_bounds = array<i64: 128, 128>}]} {
    %c0 = arith.constant 0 : index
    %c0_0 = arith.constant 0 : index
    %0 = vector.load %arg1[%c0, %c0_0] : memref<128x16xf32, #tpu.memory_space<vmem>>, vector<128x16xf32>
    %c0_1 = arith.constant 0 : index
    %c0_2 = arith.constant 0 : index
    %1 = vector.load %arg2[%c0_1, %c0_2] : memref<16x128xf32, #tpu.memory_space<vmem>>, vector<16x128xf32>
    %cst = arith.constant dense<0.000000e+00> : vector<128x128xf32>
    %2 = tpu.matmul %0, %1, %cst {dimension_numbers = #tpu.dot_dimension_numbers<[1], [0], [0], [1], [0, 0, 1, 1], [], []>} : vector<128x16xf32>, vector<16x128xf32>, vector<128x128xf32> -> vector<128x128xf32>
    %c0_3 = arith.constant 0 : index
    %c0_4 = arith.constant 0 : index
    %3 = vector.load %arg3[%c0_3, %c0_4] : memref<1x128xf32, #tpu.memory_space<vmem>>, vector<1x128xf32>
    %4 = vector.broadcast %3 : vector<1x128xf32> to vector<128x128xf32>
    %5 = arith.addf %2, %4 : vector<128x128xf32>
    %6 = arith.truncf %5 : vector<128x128xf32> to vector<128x128xbf16>
    %c0_5 = arith.constant 0 : index
    %c0_6 = arith.constant 0 : index
    %7 = vector.load %arg4[%c0_5, %c0_6] : memref<128x128xbf16, #tpu.memory_space<vmem>>, vector<128x128xbf16>
    tpu.vector_store %arg4[%c0_5, %c0_6], %6 {strides = array<i32>} : memref<128x128xbf16, #tpu.memory_space<vmem>>, vector<128x128xbf16>,
    return
  }
  func.func @transform_0(%arg0: i32) -> (i32, i32) {
    %c0_i32 = arith.constant 0 : i32
    %c0_i32_0 = arith.constant 0 : i32
    return %arg0, %c0_i32 : i32, i32
  }
  func.func @transform_1(%arg0: i32) -> (i32, i32) {
    %c0_i32 = arith.constant 0 : i32
    %c0_i32_0 = arith.constant 0 : i32
    %c0_i32_1 = arith.constant 0 : i32
    return %c0_i32, %c0_i32_0 : i32, i32
  }
  func.func @transform_2(%arg0: i32) -> (i32, i32) {
    %c0_i32 = arith.constant 0 : i32
    %c0_i32_0 = arith.constant 0 : i32
    %c0_i32_1 = arith.constant 0 : i32
    return %c0_i32, %c0_i32_0 : i32, i32
  }
  func.func @transform_3(%arg0: i32) -> (i32, i32) {
    %c0_i32 = arith.constant 0 : i32
    %c0_i32_0 = arith.constant 0 : i32
    return %arg0, %c0_i32 : i32, i32
  }
}

module attributes {stable_mosaic.version = 11 : i64} {
  func.func @_agg_kernel(%arg0: i32, %arg1: i32, %arg2: memref<128x128xbf16, #tpu.memory_space<vmem>>, %arg3: memref<128x128xbf16, #tpu.memory_space<vmem>>, %arg4: memref<128x128xf32, #tpu.memory_space<vmem>>, %arg5: memref<128x128xf32, #tpu.memory_space<vmem>>) attributes {dimension_semantics = [#tpu.dimension_semantics<parallel>, #tpu.dimension_semantics<arbitrary>], iteration_bounds = array<i64: 1, 1>, scalar_prefetch = 0 : i64, scratch_operands = 1 : i64, tpu.core_type = #tpu.core_type<tc>, window_params = [{transform_indices = @transform_0, window_bounds = array<i64: 128, 128>}, {pipeline_mode = #tpu.pipeline_mode<synchronous>, transform_indices = @transform_1, window_bounds = array<i64: 128, 128>}, {transform_indices = @transform_2, window_bounds = array<i64: 128, 128>}]} {
    %c0_i32 = arith.constant 0 : i32
    %0 = arith.cmpi eq, %arg1, %c0_i32 : i32
    %1 = arith.extui %0 : i1 to i32
    %c0_i32_0 = arith.constant 0 : i32
    %2 = arith.cmpi ne, %1, %c0_i32_0 : i32
    scf.if %2 {
      %cst_9 = arith.constant 0.000000e+00 : f32
      %15 = vector.broadcast %cst_9 : f32 to vector<128x128xf32>
      %c0_10 = arith.constant 0 : index
      %c0_11 = arith.constant 0 : index
      %16 = vector.load %arg5[%c0_10, %c0_11] : memref<128x128xf32, #tpu.memory_space<vmem>>, vector<128x128xf32>
      tpu.vector_store %arg5[%c0_10, %c0_11], %15 {strides = array<i32>} : memref<128x128xf32, #tpu.memory_space<vmem>>, vector<128x128xf32>,
    } else {
    }
    %c128_i32 = arith.constant 128 : i32
    %3 = arith.muli %arg1, %c128_i32 : i32
    %4 = tpu.assume_multiple %3, 128 : i32
    %5 = arith.index_cast %4 : i32 to index
    %c0 = arith.constant 0 : index
    %6 = vector.load %arg3[%5, %c0] : memref<128x128xbf16, #tpu.memory_space<vmem>>, vector<128x128xbf16>
    %c0_1 = arith.constant 0 : index
    %c0_2 = arith.constant 0 : index
    %7 = vector.load %arg5[%c0_1, %c0_2] : memref<128x128xf32, #tpu.memory_space<vmem>>, vector<128x128xf32>
    %c0_3 = arith.constant 0 : index
    %c0_4 = arith.constant 0 : index
    %8 = vector.load %arg2[%c0_3, %c0_4] : memref<128x128xbf16, #tpu.memory_space<vmem>>, vector<128x128xbf16>
    %cst = arith.constant dense<0.000000e+00> : vector<128x128xf32>
    %9 = tpu.matmul %8, %6, %cst {dimension_numbers = #tpu.dot_dimension_numbers<[1], [0], [0], [1], [0, 0, 1, 1], [], []>} : vector<128x128xbf16>, vector<128x128xbf16>, vector<128x128xf32> -> vector<128x128xf32>
    %10 = arith.addf %7, %9 : vector<128x128xf32>
    %c0_5 = arith.constant 0 : index
    %c0_6 = arith.constant 0 : index
    %11 = vector.load %arg5[%c0_5, %c0_6] : memref<128x128xf32, #tpu.memory_space<vmem>>, vector<128x128xf32>
    tpu.vector_store %arg5[%c0_5, %c0_6], %10 {strides = array<i32>} : memref<128x128xf32, #tpu.memory_space<vmem>>, vector<128x128xf32>,
    %c0_i32_7 = arith.constant 0 : i32
    %12 = arith.cmpi eq, %arg1, %c0_i32_7 : i32
    %13 = arith.extui %12 : i1 to i32
    %c0_i32_8 = arith.constant 0 : i32
    %14 = arith.cmpi ne, %13, %c0_i32_8 : i32
    scf.if %14 {
      %c128_i32_9 = arith.constant 128 : i32
      %15 = arith.muli %arg0, %c128_i32_9 : i32
      %16 = tpu.assume_multiple %15, 128 : i32
      %17 = arith.index_cast %16 : i32 to index
      %c0_10 = arith.constant 0 : index
      %18 = vector.load %arg3[%17, %c0_10] : memref<128x128xbf16, #tpu.memory_space<vmem>>, vector<128x128xbf16>
      %c0_11 = arith.constant 0 : index
      %c0_12 = arith.constant 0 : index
      %19 = vector.load %arg5[%c0_11, %c0_12] : memref<128x128xf32, #tpu.memory_space<vmem>>, vector<128x128xf32>
      %20 = arith.extf %18 : vector<128x128xbf16> to vector<128x128xf32>
      %21 = arith.addf %19, %20 : vector<128x128xf32>
      %22 = vector.extract_strided_slice %21 {offsets = [0, 32], sizes = [128, 1], strides = [1, 1]} : vector<128x128xf32> to vector<128x1xf32>
      %23 = vector.broadcast %22 : vector<128x1xf32> to vector<128x128xf32>
      %24 = arith.divf %21, %23 : vector<128x128xf32>
      %c0_13 = arith.constant 0 : index
      %c0_14 = arith.constant 0 : index
      %25 = vector.load %arg4[%c0_13, %c0_14] : memref<128x128xf32, #tpu.memory_space<vmem>>, vector<128x128xf32>
      tpu.vector_store %arg4[%c0_13, %c0_14], %24 {strides = array<i32>} : memref<128x128xf32, #tpu.memory_space<vmem>>, vector<128x128xf32>,
    } else {
    }
    return
  }
  func.func @transform_0(%arg0: i32, %arg1: i32) -> (i32, i32) {
    %c0_i32 = arith.constant 0 : i32
    return %arg0, %arg1 : i32, i32
  }
  func.func @transform_1(%arg0: i32, %arg1: i32) -> (i32, i32) {
    %c0_i32 = arith.constant 0 : i32
    %c0_i32_0 = arith.constant 0 : i32
    %c0_i32_1 = arith.constant 0 : i32
    return %c0_i32, %c0_i32_0 : i32, i32
  }
  func.func @transform_2(%arg0: i32, %arg1: i32) -> (i32, i32) {
    %c0_i32 = arith.constant 0 : i32
    %c0_i32_0 = arith.constant 0 : i32
    return %arg0, %c0_i32 : i32, i32
  }
}

</mosaic_0001>

<llo_original>
// kernel: gcn_layer.2
$region0: #{gcn_layer.2}
  #allocation0 [shape = 'u32[]', space=smem, size = 0x4, offset = 0x4, fixed_abs, tag = 'smem constant byte address 0x4 - core index']
  #allocation1 [shape = 'u32[144,128]{1,0:T(1,128)}', space=vmem, size = 0x12000, scoped, tag = 'internal scratch']
  %s0 = inlined_call_operand.vmem [shape: f32[128,16], index: 0, kind: input, shape index: {}]
  %s1 = inlined_call_operand.vmem [shape: f32[16,128], index: 1, kind: input, shape index: {}]
  %s2 = inlined_call_operand.vmem [shape: f32[1,128], index: 2, kind: input, shape index: {}]
  %s3 = inlined_call_operand.vmem [shape: bf16[128,128], index: 3, kind: output, shape index: {}]
  %s4 = sld [smem:[#allocation0]]
  $region22: #{gcn_layer.2} parent=0
    _
  %s6 = ssub.s32 1, %s4
  %s7 = scalar_select 0, %s6, %s4
  // Predicated region
  $region2: #{gcn_layer.2} parent=0 // pred_check
    _
  $region3: #{gcn_layer.2} parent=0 // pred_check_branch
    %9 = sbr.rel (0) target = $region5
  $region4: #{gcn_layer.2} parent=0 // pred_region
    _
  $region5: #{gcn_layer.2} parent=0 // pred_fallthru
    _
  // Predicated region
  $region6: #{gcn_layer.2} parent=0 // pred_check
    _
  $region7: #{gcn_layer.2} parent=0 // pred_check_branch
    %11 = sbr.rel (0) target = $region9
  $region8: #{gcn_layer.2} parent=0 // pred_region
    _
  $region9: #{gcn_layer.2} parent=0 // pred_fallthru
    _
  // Predicated region
  $region10: #{gcn_layer.2} parent=0 // pred_check
    _
  $region11: #{gcn_layer.2} parent=0 // pred_check_branch
    %13 = sbr.rel (0) target = $region13
  $region12: #{gcn_layer.2} parent=0 // pred_region
    _
  $region13: #{gcn_layer.2} parent=0 // pred_fallthru
    _
  %v14 = vld [vmem:[%s0] sm:$0xff]
  %v15 = vld [vmem:[%s0 + $0x8] sm:$0xff]
  %v16 = vld [vmem:[%s0 + $0x10] sm:$0xff]
  %v17 = vld [vmem:[%s0 + $0x18] sm:$0xff]
  %v18 = vld [vmem:[%s0 + $0x20] sm:$0xff]
  %v19 = vld [vmem:[%s0 + $0x28] sm:$0xff]
  %v20 = vld [vmem:[%s0 + $0x30] sm:$0xff]
  %v21 = vld [vmem:[%s0 + $0x38] sm:$0xff]
  %v22 = vld [vmem:[%s0 + $0x40] sm:$0xff]
  %v23 = vld [vmem:[%s0 + $0x48] sm:$0xff]
  %v24 = vld [vmem:[%s0 + $0x50] sm:$0xff]
  %v25 = vld [vmem:[%s0 + $0x58] sm:$0xff]
  %v26 = vld [vmem:[%s0 + $0x60] sm:$0xff]
  %v27 = vld [vmem:[%s0 + $0x68] sm:$0xff]
  %v28 = vld [vmem:[%s0 + $0x70] sm:$0xff]
  %v29 = vld [vmem:[%s0 + $0x78] sm:$0xff]
  %v30 = vld [vmem:[%s1] sm:$0xff]
  %v31 = vld [vmem:[%s1 + $0x8] sm:$0xff]
  %v32 = vld [vmem:[%s2] sm:$0x1]
  %v34 = vlaneseq
  %v35 = vshrl.u32 %v34, 7
  %v36 = vsub.s32 0, %v35
  %v37 = vrot.slane %v32, %v36
  %vm39 = vcmask 130048
  %v41 = vsel %vm39, %v14, 0
  %v44 = vsel %vm39, %v15, 0
  %v47 = vsel %vm39, %v16, 0
  %v50 = vsel %vm39, %v17, 0
  %v53 = vsel %vm39, %v18, 0
  %v56 = vsel %vm39, %v19, 0
  %v59 = vsel %vm39, %v20, 0
  %v62 = vsel %vm39, %v21, 0
  %v65 = vsel %vm39, %v22, 0
  %v68 = vsel %vm39, %v23, 0
  %v71 = vsel %vm39, %v24, 0
  %v74 = vsel %vm39, %v25, 0
  %v77 = vsel %vm39, %v26, 0
  %v80 = vsel %vm39, %v27, 0
  %v83 = vsel %vm39, %v28, 0
  %v86 = vsel %vm39, %v29, 0
  %88 = vmatprep.subr.mxu0 0.0
  %89 = vmatpush1.msra.mxu0 %v30
  %90 = vmatprep.subr.mxu0 0.0
  %91 = vmatpush1.msra.mxu0 %v31
  %92 = vmatprep.subr.mxu0 0.0
  %93 = vmatpush1.msra.mxu0 0.0
  %94 = vmatprep.subr.mxu0 0.0
  %95 = vmatpush1.msra.mxu0 0.0
  %96 = vmatprep.subr.mxu0 0.0
  %97 = vmatpush1.msra.mxu0 0.0
  %98 = vmatprep.subr.mxu0 0.0
  %99 = vmatpush1.msra.mxu0 0.0
  %100 = vmatprep.subr.mxu0 0.0
  %101 = vmatpush1.msra.mxu0 0.0
  %102 = vmatprep.subr.mxu0 0.0
  %103 = vmatpush1.msra.mxu0 0.0
  %104 = vmatprep.subr.mxu0 0.0
  %105 = vmatpush1.msra.mxu0 0.0
  %106 = vmatprep.subr.mxu0 0.0
  %107 = vmatpush1.msra.mxu0 0.0
  %108 = vmatprep.subr.mxu0 0.0
  %109 = vmatpush1.msra.mxu0 0.0
  %110 = vmatprep.subr.mxu0 0.0
  %111 = vmatpush1.msra.mxu0 0.0
  %112 = vmatprep.subr.mxu0 0.0
  %113 = vmatpush1.msra.mxu0 0.0
  %114 = vmatprep.subr.mxu0 0.0
  %115 = vmatpush1.msra.mxu0 0.0
  %116 = vmatprep.subr.mxu0 0.0
  %117 = vmatpush1.msra.mxu0 0.0
  %118 = vmatprep.subr.mxu0 0.0
  %119 = vmatpush1.msra.mxu0 0.0
  %120 = vmatprep.subr.mxu0 0.0
  %121 = vmatpush1.msra.mxu0 0.0
  %122 = vmatprep.subr.mxu0 0.0
  %123 = vmatpush1.msra.mxu0 0.0
  %124 = vmatprep.subr.mxu0 0.0
  %125 = vmatpush1.msra.mxu0 0.0
  %126 = vmatprep.subr.mxu0 0.0
  %127 = vmatpush1.msra.mxu0 0.0
  %128 = vmatprep.subr.mxu0 0.0
  %129 = vmatpush1.msra.mxu0 0.0
  %130 = vmatprep.subr.mxu0 0.0
  %131 = vmatpush1.msra.mxu0 0.0
  %132 = vmatprep.subr.mxu0 0.0
  %133 = vmatpush1.msra.mxu0 0.0
  %134 = vmatprep.subr.mxu0 0.0
  %135 = vmatpush1.msra.mxu0 0.0
  %136 = vmatprep.subr.mxu0 0.0
  %137 = vmatpush1.msra.mxu0 0.0
  %138 = vmatprep.subr.mxu0 0.0
  %139 = vmatpush1.msra.mxu0 0.0
  %140 = vmatprep.subr.mxu0 0.0
  %141 = vmatpush1.msra.mxu0 0.0
  %142 = vmatprep.subr.mxu0 0.0
  %143 = vmatpush1.msra.mxu0 0.0
  %144 = vmatprep.subr.mxu0 0.0
  %145 = vmatpush1.msra.mxu0 0.0
  %146 = vmatprep.subr.mxu0 0.0
  %147 = vmatpush1.msra.mxu0 0.0
  %148 = vmatprep.subr.mxu0 0.0
  %149 = vmatpush1.msra.mxu0 0.0
  %150 = vmatprep.subr.mxu0 0.0
  %151 = vmatpush1.msra.mxu0 0.0
  %152 = vmatprep.mubr.f32.mxu0 0.0
  %153 = vmatmul.mubr.f32.gmra.mrb[0].mxu0 %v41
  %v154 = vpop.f32.mrb[0].mxu0
  %v155 = vadd.f32 %v37, %v154
  %v156 = vpop.f32.mrb[0].mxu0
  %157 = vmatprep.mubr.f32.mxu0 0.0
  %158 = vmatmul.mubr.f32.gmra.mrb[0].mxu0 %v44
  %v159 = vpop.f32.mrb[0].mxu0
  %v160 = vadd.f32 %v37, %v159
  %v161 = vpop.f32.mrb[0].mxu0
  %162 = vmatprep.mubr.f32.mxu0 0.0
  %163 = vmatmul.mubr.f32.gmra.mrb[0].mxu0 %v47
  %v164 = vpop.f32.mrb[0].mxu0
  %v165 = vadd.f32 %v37, %v164
  %v166 = vpop.f32.mrb[0].mxu0
  %167 = vmatprep.mubr.f32.mxu0 0.0
  %168 = vmatmul.mubr.f32.gmra.mrb[0].mxu0 %v50
  %v169 = vpop.f32.mrb[0].mxu0
  %v170 = vadd.f32 %v37, %v169
  %v171 = vpop.f32.mrb[0].mxu0
  %172 = vmatprep.mubr.f32.mxu0 0.0
  %173 = vmatmul.mubr.f32.gmra.mrb[0].mxu0 %v53
  %v174 = vpop.f32.mrb[0].mxu0
  %v175 = vadd.f32 %v37, %v174
  %v176 = vpop.f32.mrb[0].mxu0
  %177 = vmatprep.mubr.f32.mxu0 0.0
  %178 = vmatmul.mubr.f32.gmra.mrb[0].mxu0 %v56
  %v179 = vpop.f32.mrb[0].mxu0
  %v180 = vadd.f32 %v37, %v179
  %v181 = vpop.f32.mrb[0].mxu0
  %182 = vmatprep.mubr.f32.mxu0 0.0
  %183 = vmatmul.mubr.f32.gmra.mrb[0].mxu0 %v59
  %v184 = vpop.f32.mrb[0].mxu0
  %v185 = vadd.f32 %v37, %v184
  %v186 = vpop.f32.mrb[0].mxu0
  %187 = vmatprep.mubr.f32.mxu0 0.0
  %188 = vmatmul.mubr.f32.gmra.mrb[0].mxu0 %v62
  %v189 = vpop.f32.mrb[0].mxu0
  %v190 = vadd.f32 %v37, %v189
  %v191 = vpop.f32.mrb[0].mxu0
  %192 = vmatprep.mubr.f32.mxu0 0.0
  %193 = vmatmul.mubr.f32.gmra.mrb[0].mxu0 %v65
  %v194 = vpop.f32.mrb[0].mxu0
  %v195 = vadd.f32 %v37, %v194
  %v196 = vpop.f32.mrb[0].mxu0
  %197 = vmatprep.mubr.f32.mxu0 0.0
  %198 = vmatmul.mubr.f32.gmra.mrb[0].mxu0 %v68
  %v199 = vpop.f32.mrb[0].mxu0
  %v200 = vadd.f32 %v37, %v199
  %v201 = vpop.f32.mrb[0].mxu0
  %202 = vmatprep.mubr.f32.mxu0 0.0
  %203 = vmatmul.mubr.f32.gmra.mrb[0].mxu0 %v71
  %v204 = vpop.f32.mrb[0].mxu0
  %v205 = vadd.f32 %v37, %v204
  %v206 = vpop.f32.mrb[0].mxu0
  %207 = vmatprep.mubr.f32.mxu0 0.0
  %208 = vmatmul.mubr.f32.gmra.mrb[0].mxu0 %v74
  %v209 = vpop.f32.mrb[0].mxu0
  %v210 = vadd.f32 %v37, %v209
  %v211 = vpop.f32.mrb[0].mxu0
  %212 = vmatprep.mubr.f32.mxu0 0.0
  %213 = vmatmul.mubr.f32.gmra.mrb[0].mxu0 %v77
  %v214 = vpop.f32.mrb[0].mxu0
  %v215 = vadd.f32 %v37, %v214
  %v216 = vpop.f32.mrb[0].mxu0
  %217 = vmatprep.mubr.f32.mxu0 0.0
  %218 = vmatmul.mubr.f32.gmra.mrb[0].mxu0 %v80
  %v219 = vpop.f32.mrb[0].mxu0
  %v220 = vadd.f32 %v37, %v219
  %v221 = vpop.f32.mrb[0].mxu0
  %222 = vmatprep.mubr.f32.mxu0 0.0
  %223 = vmatmul.mubr.f32.gmra.mrb[0].mxu0 %v83
  %v224 = vpop.f32.mrb[0].mxu0
  %v225 = vadd.f32 %v37, %v224
  %v226 = vpop.f32.mrb[0].mxu0
  %227 = vmatprep.mubr.f32.mxu0 0.0
  %228 = vmatmul.mubr.f32.gmra.mrb[0].mxu0 %v86
  %v229 = vpop.f32.mrb[0].mxu0
  %v230 = vadd.f32 %v37, %v229
  %v231 = vpop.f32.mrb[0].mxu0
  %232 = vdwg.mxu0
  %v233 = vpack.c.bf16 %v160, %v155
  %v234 = vpack.c.bf16 %v170, %v165
  %v235 = vpack.c.bf16 %v180, %v175
  %v236 = vpack.c.bf16 %v190, %v185
  %v237 = vpack.c.bf16 %v200, %v195
  %v238 = vpack.c.bf16 %v210, %v205
  %v239 = vpack.c.bf16 %v220, %v215
  %v240 = vpack.c.bf16 %v230, %v225
  %v249 = vunpack.c.l.b16 %v233
  %v250 = vunpack.c.h.b16 %v233
  %v251 = vunpack.c.l.b16 %v234
  %v252 = vunpack.c.h.b16 %v234
  %v253 = vunpack.c.l.b16 %v235
  %v254 = vunpack.c.h.b16 %v235
  %v255 = vunpack.c.l.b16 %v236
  %v256 = vunpack.c.h.b16 %v236
  %v257 = vunpack.c.l.b16 %v237
  %v258 = vunpack.c.h.b16 %v237
  %v259 = vunpack.c.l.b16 %v238
  %v260 = vunpack.c.h.b16 %v238
  %v261 = vunpack.c.l.b16 %v239
  %v262 = vunpack.c.h.b16 %v239
  %v263 = vunpack.c.l.b16 %v240
  %v264 = vunpack.c.h.b16 %v240
  %v265 = vpack.c.b16 %v249, %v249
  %v266 = vpack.c.b16 %v250, %v250
  %v267 = vpack.c.b16 %v251, %v251
  %v268 = vpack.c.b16 %v252, %v252
  %v269 = vpack.c.b16 %v253, %v253
  %v270 = vpack.c.b16 %v254, %v254
  %v271 = vpack.c.b16 %v255, %v255
  %v272 = vpack.c.b16 %v256, %v256
  %v273 = vpack.c.b16 %v257, %v257
  %v274 = vpack.c.b16 %v258, %v258
  %v275 = vpack.c.b16 %v259, %v259
  %v276 = vpack.c.b16 %v260, %v260
  %v277 = vpack.c.b16 %v261, %v261
  %v278 = vpack.c.b16 %v262, %v262
  %v279 = vpack.c.b16 %v263, %v263
  %v280 = vpack.c.b16 %v264, %v264
  %297 = vst [vmem:[%s3] sm:$0xf] %v265
  %298 = vst [vmem:[%s3 + $0x4] sm:$0xf] %v266
  %299 = vst [vmem:[%s3 + $0x8] sm:$0xf] %v267
  %300 = vst [vmem:[%s3 + $0xc] sm:$0xf] %v268
  %301 = vst [vmem:[%s3 + $0x10] sm:$0xf] %v269
  %302 = vst [vmem:[%s3 + $0x14] sm:$0xf] %v270
  %303 = vst [vmem:[%s3 + $0x18] sm:$0xf] %v271
  %304 = vst [vmem:[%s3 + $0x1c] sm:$0xf] %v272
  %305 = vst [vmem:[%s3 + $0x20] sm:$0xf] %v273
  %306 = vst [vmem:[%s3 + $0x24] sm:$0xf] %v274
  %307 = vst [vmem:[%s3 + $0x28] sm:$0xf] %v275
  %308 = vst [vmem:[%s3 + $0x2c] sm:$0xf] %v276
  %309 = vst [vmem:[%s3 + $0x30] sm:$0xf] %v277
  %310 = vst [vmem:[%s3 + $0x34] sm:$0xf] %v278
  %311 = vst [vmem:[%s3 + $0x38] sm:$0xf] %v279
  %312 = vst [vmem:[%s3 + $0x3c] sm:$0xf] %v280
  // Predicated region
  $region14: #{gcn_layer.2} parent=0 // pred_check
    _
  $region15: #{gcn_layer.2} parent=0 // pred_check_branch
    %314 = sbr.rel (0) target = $region17
  $region16: #{gcn_layer.2} parent=0 // pred_region
    _
  $region17: #{gcn_layer.2} parent=0 // pred_fallthru
    _
  // Predicated region
  $region18: #{gcn_layer.2} parent=0 // pred_check
    _
  $region19: #{gcn_layer.2} parent=0 // pred_check_branch
    %316 = sbr.rel (0) target = $region21
  $region20: #{gcn_layer.2} parent=0 // pred_region
    _
  $region21: #{gcn_layer.2} parent=0 // pred_fallthru
    _

// kernel: gcn_layer.3
$region0: #{gcn_layer.3}
  #allocation0 [shape = 'u32[]', space=smem, size = 0x4, offset = 0x4, fixed_abs, tag = 'smem constant byte address 0x4 - core index']
  #allocation1 [shape = 'u32[144,128]{1,0:T(1,128)}', space=vmem, size = 0x12000, scoped, tag = 'internal scratch']
  #allocation2 [shape = 'f32[128,128]{1,0:T(8,128)}', space=vmem, size = 0x10000, scoped, tag = 'scratch operand']
  %s0 = inlined_call_operand.vmem [shape: bf16[128,128], index: 0, kind: input, shape index: {}]
  %s1 = inlined_call_operand.vmem [shape: bf16[128,128], index: 1, kind: input, shape index: {}]
  %s2 = inlined_call_operand.vmem [shape: f32[128,128], index: 2, kind: output, shape index: {}]
  %s3 = sld [smem:[#allocation0]]
  $region26: #{gcn_layer.3} parent=0
    _
  %s5 = ssub.s32 1, %s3
  %s6 = scalar_select 0, %s5, %s3
  // Predicated region
  $region2: #{gcn_layer.3} parent=0 // pred_check
    _
  $region3: #{gcn_layer.3} parent=0 // pred_check_branch
    %8 = sbr.rel (0) target = $region5
  $region4: #{gcn_layer.3} parent=0 // pred_region
    _
  $region5: #{gcn_layer.3} parent=0 // pred_fallthru
    _
  // Predicated region
  $region6: #{gcn_layer.3} parent=0 // pred_check
    _
  $region7: #{gcn_layer.3} parent=0 // pred_check_branch
    %10 = sbr.rel (0) target = $region9
  $region8: #{gcn_layer.3} parent=0 // pred_region
    _
  $region9: #{gcn_layer.3} parent=0 // pred_fallthru
    _
  %p12 = scmp.eq.s32.totalorder 0, 0
  // Predicated region
  $region10: #{gcn_layer.3} parent=0 // pred_check
    %p13 = pneg %p12
  $region11: #{gcn_layer.3} parent=0 // pred_check_branch
    %15 = sbr.rel (%p13) target = $region13
  $region12: #{gcn_layer.3} parent=0 // pred_region
    %16 = vst [vmem:[#allocation2] sm:$0xff] 0.0
    %17 = vst [vmem:[#allocation2 + $0x8] sm:$0xff] 0.0
    %18 = vst [vmem:[#allocation2 + $0x10] sm:$0xff] 0.0
    %19 = vst [vmem:[#allocation2 + $0x18] sm:$0xff] 0.0
    %20 = vst [vmem:[#allocation2 + $0x20] sm:$0xff] 0.0
    %21 = vst [vmem:[#allocation2 + $0x28] sm:$0xff] 0.0
    %22 = vst [vmem:[#allocation2 + $0x30] sm:$0xff] 0.0
    %23 = vst [vmem:[#allocation2 + $0x38] sm:$0xff] 0.0
    %24 = vst [vmem:[#allocation2 + $0x40] sm:$0xff] 0.0
    %25 = vst [vmem:[#allocation2 + $0x48] sm:$0xff] 0.0
    %26 = vst [vmem:[#allocation2 + $0x50] sm:$0xff] 0.0
    %27 = vst [vmem:[#allocation2 + $0x58] sm:$0xff] 0.0
    %28 = vst [vmem:[#allocation2 + $0x60] sm:$0xff] 0.0
    %29 = vst [vmem:[#allocation2 + $0x68] sm:$0xff] 0.0
    %30 = vst [vmem:[#allocation2 + $0x70] sm:$0xff] 0.0
    %31 = vst [vmem:[#allocation2 + $0x78] sm:$0xff] 0.0
  $region13: #{gcn_layer.3} parent=0 // pred_fallthru
    _
  %s32 = smul.u32 0, 128
  %s33 = sshra.s32 %s32, 3
  %s34 = sand.u32 %s32, 7
  %s35 = smul.addr %s33, 4
  %s36 = scalar_lea.vmem %s1, %s35
  %v37 = vld [vmem:[%s36] sm:$0xf]
  %v38 = vld [vmem:[%s36 + $0x4] sm:$0xf]
  %v39 = vld [vmem:[%s36 + $0x8] sm:$0xf]
  %v40 = vld [vmem:[%s36 + $0xc] sm:$0xf]
  %v41 = vld [vmem:[%s36 + $0x10] sm:$0xf]
  %v42 = vld [vmem:[%s36 + $0x14] sm:$0xf]
  %v43 = vld [vmem:[%s36 + $0x18] sm:$0xf]
  %v44 = vld [vmem:[%s36 + $0x1c] sm:$0xf]
  %v45 = vld [vmem:[%s36 + $0x20] sm:$0xf]
  %v46 = vld [vmem:[%s36 + $0x24] sm:$0xf]
  %v47 = vld [vmem:[%s36 + $0x28] sm:$0xf]
  %v48 = vld [vmem:[%s36 + $0x2c] sm:$0xf]
  %v49 = vld [vmem:[%s36 + $0x30] sm:$0xf]
  %v50 = vld [vmem:[%s36 + $0x34] sm:$0xf]
  %v51 = vld [vmem:[%s36 + $0x38] sm:$0xf]
  %v52 = vld [vmem:[%s36 + $0x3c] sm:$0xf]
  %v53 = vld [vmem:[#allocation2] sm:$0xff]
  %v54 = vld [vmem:[#allocation2 + $0x8] sm:$0xff]
  %v55 = vld [vmem:[#allocation2 + $0x10] sm:$0xff]
  %v56 = vld [vmem:[#allocation2 + $0x18] sm:$0xff]
  %v57 = vld [vmem:[#allocation2 + $0x20] sm:$0xff]
  %v58 = vld [vmem:[#allocation2 + $0x28] sm:$0xff]
  %v59 = vld [vmem:[#allocation2 + $0x30] sm:$0xff]
  %v60 = vld [vmem:[#allocation2 + $0x38] sm:$0xff]
  %v61 = vld [vmem:[#allocation2 + $0x40] sm:$0xff]
  %v62 = vld [vmem:[#allocation2 + $0x48] sm:$0xff]
  %v63 = vld [vmem:[#allocation2 + $0x50] sm:$0xff]
  %v64 = vld [vmem:[#allocation2 + $0x58] sm:$0xff]
  %v65 = vld [vmem:[#allocation2 + $0x60] sm:$0xff]
  %v66 = vld [vmem:[#allocation2 + $0x68] sm:$0xff]
  %v67 = vld [vmem:[#allocation2 + $0x70] sm:$0xff]
  %v68 = vld [vmem:[#allocation2 + $0x78] sm:$0xff]
  %v69 = vld [vmem:[%s0] sm:$0xf]
  %v70 = vld [vmem:[%s0 + $0x4] sm:$0xf]
  %v71 = vld [vmem:[%s0 + $0x8] sm:$0xf]
  %v72 = vld [vmem:[%s0 + $0xc] sm:$0xf]
  %v73 = vld [vmem:[%s0 + $0x10] sm:$0xf]
  %v74 = vld [vmem:[%s0 + $0x14] sm:$0xf]
  %v75 = vld [vmem:[%s0 + $0x18] sm:$0xf]
  %v76 = vld [vmem:[%s0 + $0x1c] sm:$0xf]
  %v77 = vld [vmem:[%s0 + $0x20] sm:$0xf]
  %v78 = vld [vmem:[%s0 + $0x24] sm:$0xf]
  %v79 = vld [vmem:[%s0 + $0x28] sm:$0xf]
  %v80 = vld [vmem:[%s0 + $0x2c] sm:$0xf]
  %v81 = vld [vmem:[%s0 + $0x30] sm:$0xf]
  %v82 = vld [vmem:[%s0 + $0x34] sm:$0xf]
  %v83 = vld [vmem:[%s0 + $0x38] sm:$0xf]
  %v84 = vld [vmem:[%s0 + $0x3c] sm:$0xf]
  %v101 = vunpack.c.l.b16 %v69
  %v102 = vunpack.c.l.b16 %v70
  %v103 = vunpack.c.l.b16 %v71
  %v104 = vunpack.c.l.b16 %v72
  %v105 = vunpack.c.l.b16 %v73
  %v106 = vunpack.c.l.b16 %v74
  %v107 = vunpack.c.l.b16 %v75
  %v108 = vunpack.c.l.b16 %v76
  %v109 = vunpack.c.l.b16 %v77
  %v110 = vunpack.c.l.b16 %v78
  %v111 = vunpack.c.l.b16 %v79
  %v112 = vunpack.c.l.b16 %v80
  %v113 = vunpack.c.l.b16 %v81
  %v114 = vunpack.c.l.b16 %v82
  %v115 = vunpack.c.l.b16 %v83
  %v116 = vunpack.c.l.b16 %v84
  %v117 = vpack.c.b16 %v102, %v101
  %v118 = vpack.c.b16 %v104, %v103
  %v119 = vpack.c.b16 %v106, %v105
  %v120 = vpack.c.b16 %v108, %v107
  %v121 = vpack.c.b16 %v110, %v109
  %v122 = vpack.c.b16 %v112, %v111
  %v123 = vpack.c.b16 %v114, %v113
  %v124 = vpack.c.b16 %v116, %v115
  %v149 = vunpack.c.l.b16 %v37
  %v150 = vunpack.c.l.b16 %v38
  %v151 = vunpack.c.l.b16 %v39
  %v152 = vunpack.c.l.b16 %v40
  %v153 = vunpack.c.l.b16 %v41
  %v154 = vunpack.c.l.b16 %v42
  %v155 = vunpack.c.l.b16 %v43
  %v156 = vunpack.c.l.b16 %v44
  %v157 = vunpack.c.l.b16 %v45
  %v158 = vunpack.c.l.b16 %v46
  %v159 = vunpack.c.l.b16 %v47
  %v160 = vunpack.c.l.b16 %v48
  %v161 = vunpack.c.l.b16 %v49
  %v162 = vunpack.c.l.b16 %v50
  %v163 = vunpack.c.l.b16 %v51
  %v164 = vunpack.c.l.b16 %v52
  %v165 = vpack.c.b16 %v150, %v149
  %v166 = vpack.c.b16 %v152, %v151
  %v167 = vpack.c.b16 %v154, %v153
  %v168 = vpack.c.b16 %v156, %v155
  %v169 = vpack.c.b16 %v158, %v157
  %v170 = vpack.c.b16 %v160, %v159
  %v171 = vpack.c.b16 %v162, %v161
  %v172 = vpack.c.b16 %v164, %v163
  %181 = vmatprep.subr.bf16.mxu0 0
  %182 = vmatpush1.bf16.msra.mxu0 %v165
  %183 = vmatprep.subr.bf16.mxu0 0
  %184 = vmatpush1.bf16.msra.mxu0 %v166
  %185 = vmatprep.subr.bf16.mxu0 0
  %186 = vmatpush1.bf16.msra.mxu0 %v167
  %187 = vmatprep.subr.bf16.mxu0 0
  %188 = vmatpush1.bf16.msra.mxu0 %v168
  %189 = vmatprep.subr.bf16.mxu0 0
  %190 = vmatpush1.bf16.msra.mxu0 %v169
  %191 = vmatprep.subr.bf16.mxu0 0
  %192 = vmatpush1.bf16.msra.mxu0 %v170
  %193 = vmatprep.subr.bf16.mxu0 0
  %194 = vmatpush1.bf16.msra.mxu0 %v171
  %195 = vmatprep.subr.bf16.mxu0 0
  %196 = vmatpush1.bf16.msra.mxu0 %v172
  %197 = vmatprep.subr.bf16.mxu0 0
  %198 = vmatpush1.bf16.msra.mxu0 0
  %199 = vmatprep.subr.bf16.mxu0 0
  %200 = vmatpush1.bf16.msra.mxu0 0
  %201 = vmatprep.subr.bf16.mxu0 0
  %202 = vmatpush1.bf16.msra.mxu0 0
  %203 = vmatprep.subr.bf16.mxu0 0
  %204 = vmatpush1.bf16.msra.mxu0 0
  %205 = vmatprep.subr.bf16.mxu0 0
  %206 = vmatpush1.bf16.msra.mxu0 0
  %207 = vmatprep.subr.bf16.mxu0 0
  %208 = vmatpush1.bf16.msra.mxu0 0
  %209 = vmatprep.subr.bf16.mxu0 0
  %210 = vmatpush1.bf16.msra.mxu0 0
  %211 = vmatprep.subr.bf16.mxu0 0
  %212 = vmatpush1.bf16.msra.mxu0 0
  %213 = vmatprep.mubr.bf16.mxu0 0
  %214 = vmatmul.mubr.bf16.gmra.mrb[0].mxu0 %v117
  %v215 = vpop.f32.mrb[0].mxu0
  %v216 = vadd.f32 0.0, %v215
  %v217 = vpop.f32.mrb[0].mxu0
  %v218 = vpop.f32.mrb[0].mxu0
  %v219 = vadd.f32 0.0, %v218
  %v220 = vpop.f32.mrb[0].mxu0
  %221 = vmatprep.mubr.bf16.mxu0 0
  %222 = vmatmul.mubr.bf16.gmra.mrb[0].mxu0 %v118
  %v223 = vpop.f32.mrb[0].mxu0
  %v224 = vadd.f32 0.0, %v223
  %v225 = vpop.f32.mrb[0].mxu0
  %v226 = vpop.f32.mrb[0].mxu0
  %v227 = vadd.f32 0.0, %v226
  %v228 = vpop.f32.mrb[0].mxu0
  %229 = vmatprep.mubr.bf16.mxu0 0
  %230 = vmatmul.mubr.bf16.gmra.mrb[0].mxu0 %v119
  %v231 = vpop.f32.mrb[0].mxu0
  %v232 = vadd.f32 0.0, %v231
  %v233 = vpop.f32.mrb[0].mxu0
  %v234 = vpop.f32.mrb[0].mxu0
  %v235 = vadd.f32 0.0, %v234
  %v236 = vpop.f32.mrb[0].mxu0
  %237 = vmatprep.mubr.bf16.mxu0 0
  %238 = vmatmul.mubr.bf16.gmra.mrb[0].mxu0 %v120
  %v239 = vpop.f32.mrb[0].mxu0
  %v240 = vadd.f32 0.0, %v239
  %v241 = vpop.f32.mrb[0].mxu0
  %v242 = vpop.f32.mrb[0].mxu0
  %v243 = vadd.f32 0.0, %v242
  %v244 = vpop.f32.mrb[0].mxu0
  %245 = vmatprep.mubr.bf16.mxu0 0
  %246 = vmatmul.mubr.bf16.gmra.mrb[0].mxu0 %v121
  %v247 = vpop.f32.mrb[0].mxu0
  %v248 = vadd.f32 0.0, %v247
  %v249 = vpop.f32.mrb[0].mxu0
  %v250 = vpop.f32.mrb[0].mxu0
  %v251 = vadd.f32 0.0, %v250
  %v252 = vpop.f32.mrb[0].mxu0
  %253 = vmatprep.mubr.bf16.mxu0 0
  %254 = vmatmul.mubr.bf16.gmra.mrb[0].mxu0 %v122
  %v255 = vpop.f32.mrb[0].mxu0
  %v256 = vadd.f32 0.0, %v255
  %v257 = vpop.f32.mrb[0].mxu0
  %v258 = vpop.f32.mrb[0].mxu0
  %v259 = vadd.f32 0.0, %v258
  %v260 = vpop.f32.mrb[0].mxu0
  %261 = vmatprep.mubr.bf16.mxu0 0
  %262 = vmatmul.mubr.bf16.gmra.mrb[0].mxu0 %v123
  %v263 = vpop.f32.mrb[0].mxu0
  %v264 = vadd.f32 0.0, %v263
  %v265 = vpop.f32.mrb[0].mxu0
  %v266 = vpop.f32.mrb[0].mxu0
  %v267 = vadd.f32 0.0, %v266
  %v268 = vpop.f32.mrb[0].mxu0
  %269 = vmatprep.mubr.bf16.mxu0 0
  %270 = vmatmul.mubr.bf16.gmra.mrb[0].mxu0 %v124
  %v271 = vpop.f32.mrb[0].mxu0
  %v272 = vadd.f32 0.0, %v271
  %v273 = vpop.f32.mrb[0].mxu0
  %v274 = vpop.f32.mrb[0].mxu0
  %v275 = vadd.f32 0.0, %v274
  %v276 = vpop.f32.mrb[0].mxu0
  %277 = vdwg.mxu0
  %v278 = vadd.f32 %v53, %v216
  %v279 = vadd.f32 %v54, %v219
  %v280 = vadd.f32 %v55, %v224
  %v281 = vadd.f32 %v56, %v227
  %v282 = vadd.f32 %v57, %v232
  %v283 = vadd.f32 %v58, %v235
  %v284 = vadd.f32 %v59, %v240
  %v285 = vadd.f32 %v60, %v243
  %v286 = vadd.f32 %v61, %v248
  %v287 = vadd.f32 %v62, %v251
  %v288 = vadd.f32 %v63, %v256
  %v289 = vadd.f32 %v64, %v259
  %v290 = vadd.f32 %v65, %v264
  %v291 = vadd.f32 %v66, %v267
  %v292 = vadd.f32 %v67, %v272
  %v293 = vadd.f32 %v68, %v275
  %294 = vst [vmem:[#allocation2] sm:$0xff] %v278
  %295 = vst [vmem:[#allocation2 + $0x8] sm:$0xff] %v279
  %296 = vst [vmem:[#allocation2 + $0x10] sm:$0xff] %v280
  %297 = vst [vmem:[#allocation2 + $0x18] sm:$0xff] %v281
  %298 = vst [vmem:[#allocation2 + $0x20] sm:$0xff] %v282
  %299 = vst [vmem:[#allocation2 + $0x28] sm:$0xff] %v283
  %300 = vst [vmem:[#allocation2 + $0x30] sm:$0xff] %v284
  %301 = vst [vmem:[#allocation2 + $0x38] sm:$0xff] %v285
  %302 = vst [vmem:[#allocation2 + $0x40] sm:$0xff] %v286
  %303 = vst [vmem:[#allocation2 + $0x48] sm:$0xff] %v287
  %304 = vst [vmem:[#allocation2 + $0x50] sm:$0xff] %v288
  %305 = vst [vmem:[#allocation2 + $0x58] sm:$0xff] %v289
  %306 = vst [vmem:[#allocation2 + $0x60] sm:$0xff] %v290
  %307 = vst [vmem:[#allocation2 + $0x68] sm:$0xff] %v291
  %308 = vst [vmem:[#allocation2 + $0x70] sm:$0xff] %v292
  %309 = vst [vmem:[#allocation2 + $0x78] sm:$0xff] %v293
  // Predicated region
  $region14: #{gcn_layer.3} parent=0 // pred_check
    %p310 = pneg %p12
  $region15: #{gcn_layer.3} parent=0 // pred_check_branch
    %312 = sbr.rel (%p310) target = $region17
  $region16: #{gcn_layer.3} parent=0 // pred_region
    %s313 = smul.u32 0, 128
    %s314 = sshra.s32 %s313, 3
    %s315 = sand.u32 %s313, 7
    %s316 = smul.addr %s314, 4
    %s317 = scalar_lea.vmem %s1, %s316
    %v318 = vld [vmem:[%s317] sm:$0xf]
    %v319 = vld [vmem:[%s317 + $0x4] sm:$0xf]
    %v320 = vld [vmem:[%s317 + $0x8] sm:$0xf]
    %v321 = vld [vmem:[%s317 + $0xc] sm:$0xf]
    %v322 = vld [vmem:[%s317 + $0x10] sm:$0xf]
    %v323 = vld [vmem:[%s317 + $0x14] sm:$0xf]
    %v324 = vld [vmem:[%s317 + $0x18] sm:$0xf]
    %v325 = vld [vmem:[%s317 + $0x1c] sm:$0xf]
    %v326 = vld [vmem:[%s317 + $0x20] sm:$0xf]
    %v327 = vld [vmem:[%s317 + $0x24] sm:$0xf]
    %v328 = vld [vmem:[%s317 + $0x28] sm:$0xf]
    %v329 = vld [vmem:[%s317 + $0x2c] sm:$0xf]
    %v330 = vld [vmem:[%s317 + $0x30] sm:$0xf]
    %v331 = vld [vmem:[%s317 + $0x34] sm:$0xf]
    %v332 = vld [vmem:[%s317 + $0x38] sm:$0xf]
    %v333 = vld [vmem:[%s317 + $0x3c] sm:$0xf]
    %v334 = vld [vmem:[#allocation2] sm:$0xff]
    %v335 = vld [vmem:[#allocation2 + $0x8] sm:$0xff]
    %v336 = vld [vmem:[#allocation2 + $0x10] sm:$0xff]
    %v337 = vld [vmem:[#allocation2 + $0x18] sm:$0xff]
    %v338 = vld [vmem:[#allocation2 + $0x20] sm:$0xff]
    %v339 = vld [vmem:[#allocation2 + $0x28] sm:$0xff]
    %v340 = vld [vmem:[#allocation2 + $0x30] sm:$0xff]
    %v341 = vld [vmem:[#allocation2 + $0x38] sm:$0xff]
    %v342 = vld [vmem:[#allocation2 + $0x40] sm:$0xff]
    %v343 = vld [vmem:[#allocation2 + $0x48] sm:$0xff]
    %v344 = vld [vmem:[#allocation2 + $0x50] sm:$0xff]
    %v345 = vld [vmem:[#allocation2 + $0x58] sm:$0xff]
    %v346 = vld [vmem:[#allocation2 + $0x60] sm:$0xff]
    %v347 = vld [vmem:[#allocation2 + $0x68] sm:$0xff]
    %v348 = vld [vmem:[#allocation2 + $0x70] sm:$0xff]
    %v349 = vld [vmem:[#allocation2 + $0x78] sm:$0xff]
    %v350 = vunpack.c.l.bf16 %v318
    %v351 = vunpack.c.l.bf16 %v319
    %v352 = vunpack.c.l.bf16 %v320
    %v353 = vunpack.c.l.bf16 %v321
    %v354 = vunpack.c.l.bf16 %v322
    %v355 = vunpack.c.l.bf16 %v323
    %v356 = vunpack.c.l.bf16 %v324
    %v357 = vunpack.c.l.bf16 %v325
    %v358 = vunpack.c.l.bf16 %v326
    %v359 = vunpack.c.l.bf16 %v327
    %v360 = vunpack.c.l.bf16 %v328
    %v361 = vunpack.c.l.bf16 %v329
    %v362 = vunpack.c.l.bf16 %v330
    %v363 = vunpack.c.l.bf16 %v331
    %v364 = vunpack.c.l.bf16 %v332
    %v365 = vunpack.c.l.bf16 %v333
    %v366 = vadd.f32 %v334, %v350
    %v367 = vadd.f32 %v335, %v351
    %v368 = vadd.f32 %v336, %v352
    %v369 = vadd.f32 %v337, %v353
    %v370 = vadd.f32 %v338, %v354
    %v371 = vadd.f32 %v339, %v355
    %v372 = vadd.f32 %v340, %v356
    %v373 = vadd.f32 %v341, %v357
    %v374 = vadd.f32 %v342, %v358
    %v375 = vadd.f32 %v343, %v359
    %v376 = vadd.f32 %v344, %v360
    %v377 = vadd.f32 %v345, %v361
    %v378 = vadd.f32 %v346, %v362
    %v379 = vadd.f32 %v347, %v363
    %v380 = vadd.f32 %v348, %v364
    %v381 = vadd.f32 %v349, %v365
    %383 = vset.pattern.permute.xlu0 32
    %384 = vperm.xlu0 %383, %v366
    %v385 = vpop.permute.xlu0 %384
    %388 = vset.pattern.permute.xlu0 32
    %389 = vperm.xlu0 %388, %v367
    %v390 = vpop.permute.xlu0 %389
    %393 = vset.pattern.permute.xlu0 32
    %394 = vperm.xlu0 %393, %v368
    %v395 = vpop.permute.xlu0 %394
    %398 = vset.pattern.permute.xlu0 32
    %399 = vperm.xlu0 %398, %v369
    %v400 = vpop.permute.xlu0 %399
    %403 = vset.pattern.permute.xlu0 32
    %404 = vperm.xlu0 %403, %v370
    %v405 = vpop.permute.xlu0 %404
    %408 = vset.pattern.permute.xlu0 32
    %409 = vperm.xlu0 %408, %v371
    %v410 = vpop.permute.xlu0 %409
    %413 = vset.pattern.permute.xlu0 32
    %414 = vperm.xlu0 %413, %v372
    %v415 = vpop.permute.xlu0 %414
    %418 = vset.pattern.permute.xlu0 32
    %419 = vperm.xlu0 %418, %v373
    %v420 = vpop.permute.xlu0 %419
    %423 = vset.pattern.permute.xlu0 32
    %424 = vperm.xlu0 %423, %v374
    %v425 = vpop.permute.xlu0 %424
    %428 = vset.pattern.permute.xlu0 32
    %429 = vperm.xlu0 %428, %v375
    %v430 = vpop.permute.xlu0 %429
    %433 = vset.pattern.permute.xlu0 32
    %434 = vperm.xlu0 %433, %v376
    %v435 = vpop.permute.xlu0 %434
    %438 = vset.pattern.permute.xlu0 32
    %439 = vperm.xlu0 %438, %v377
    %v440 = vpop.permute.xlu0 %439
    %443 = vset.pattern.permute.xlu0 32
    %444 = vperm.xlu0 %443, %v378
    %v445 = vpop.permute.xlu0 %444
    %448 = vset.pattern.permute.xlu0 32
    %449 = vperm.xlu0 %448, %v379
    %v450 = vpop.permute.xlu0 %449
    %453 = vset.pattern.permute.xlu0 32
    %454 = vperm.xlu0 %453, %v380
    %v455 = vpop.permute.xlu0 %454
    %458 = vset.pattern.permute.xlu0 32
    %459 = vperm.xlu0 %458, %v381
    %v460 = vpop.permute.xlu0 %459
    %v462 = vrcp.pop %v385
    %v463 = vmul.f32 %v366, %v462
    %v464 = vrcp.pop %v390
    %v465 = vmul.f32 %v367, %v464
    %v466 = vrcp.pop %v395
    %v467 = vmul.f32 %v368, %v466
    %v468 = vrcp.pop %v400
    %v469 = vmul.f32 %v369, %v468
    %v470 = vrcp.pop %v405
    %v471 = vmul.f32 %v370, %v470
    %v472 = vrcp.pop %v410
    %v473 = vmul.f32 %v371, %v472
    %v474 = vrcp.pop %v415
    %v475 = vmul.f32 %v372, %v474
    %v476 = vrcp.pop %v420
    %v477 = vmul.f32 %v373, %v476
    %v478 = vrcp.pop %v425
    %v479 = vmul.f32 %v374, %v478
    %v480 = vrcp.pop %v430
    %v481 = vmul.f32 %v375, %v480
    %v482 = vrcp.pop %v435
    %v483 = vmul.f32 %v376, %v482
    %v484 = vrcp.pop %v440
    %v485 = vmul.f32 %v377, %v484
    %v486 = vrcp.pop %v445
    %v487 = vmul.f32 %v378, %v486
    %v488 = vrcp.pop %v450
    %v489 = vmul.f32 %v379, %v488
    %v490 = vrcp.pop %v455
    %v491 = vmul.f32 %v380, %v490
    %v492 = vrcp.pop %v460
    %v493 = vmul.f32 %v381, %v492
    %494 = vst [vmem:[%s2] sm:$0xff] %v463
    %495 = vst [vmem:[%s2 + $0x8] sm:$0xff] %v465
    %496 = vst [vmem:[%s2 + $0x10] sm:$0xff] %v467
    %497 = vst [vmem:[%s2 + $0x18] sm:$0xff] %v469
    %498 = vst [vmem:[%s2 + $0x20] sm:$0xff] %v471
    %499 = vst [vmem:[%s2 + $0x28] sm:$0xff] %v473
    %500 = vst [vmem:[%s2 + $0x30] sm:$0xff] %v475
    %501 = vst [vmem:[%s2 + $0x38] sm:$0xff] %v477
    %502 = vst [vmem:[%s2 + $0x40] sm:$0xff] %v479
    %503 = vst [vmem:[%s2 + $0x48] sm:$0xff] %v481
    %504 = vst [vmem:[%s2 + $0x50] sm:$0xff] %v483
    %505 = vst [vmem:[%s2 + $0x58] sm:$0xff] %v485
    %506 = vst [vmem:[%s2 + $0x60] sm:$0xff] %v487
    %507 = vst [vmem:[%s2 + $0x68] sm:$0xff] %v489
    %508 = vst [vmem:[%s2 + $0x70] sm:$0xff] %v491
    %509 = vst [vmem:[%s2 + $0x78] sm:$0xff] %v493
  $region17: #{gcn_layer.3} parent=0 // pred_fallthru
    _
  // Predicated region
  $region18: #{gcn_layer.3} parent=0 // pred_check
    _
  $region19: #{gcn_layer.3} parent=0 // pred_check_branch
    %511 = sbr.rel (0) target = $region21
  $region20: #{gcn_layer.3} parent=0 // pred_region
    _
  $region21: #{gcn_layer.3} parent=0 // pred_fallthru
    _
  // Predicated region
  $region22: #{gcn_layer.3} parent=0 // pred_check
    _
  $region23: #{gcn_layer.3} parent=0 // pred_check_branch
    %513 = sbr.rel (0) target = $region25
  $region24: #{gcn_layer.3} parent=0 // pred_region
    _
  $region25: #{gcn_layer.3} parent=0 // pred_fallthru
    _

</llo_original>
